<compile_context>
chip_gen: v7x
topology: tpu7x:2x2x1
jax: 0.10.0
libtpu: 0.0.40
codegen_flags: <defaults>
</compile_context>

<pallas_src>
import functools
import math

import jax
import jax.numpy as jnp
import numpy as np
from jax import lax
from jax.experimental import pallas as pl
from jax.experimental.pallas import tpu as pltpu


def _mha_kernel(x_ref, wqkv_ref, bqkv_ref, wp_ref, bp_ref, o_ref,
                *, n_head, head_size):
    # One grid step == one batch element. QKV projection, masked softmax
    # attention per head, and the output projection are all fused.
    x = x_ref[0]                                # (T, D) bf16
    T = x.shape[0]
    H = head_size
    C = n_head * H

    # Fused QKV projection: single lane-dense matmul (bf16 in, f32 acc).
    qkv = jnp.dot(x, wqkv_ref[...], preferred_element_type=jnp.float32)
    qkv = qkv + bqkv_ref[...]                   # (T, 3*C) f32

    # Causal mask (tril == 0 -> masked). Use a large finite negative so a
    # fully-masked row could never yield exp(-inf - -inf) = NaN.
    row = lax.broadcasted_iota(jnp.int32, (T, T), 0)
    col = lax.broadcasted_iota(jnp.int32, (T, T), 1)
    causal = row >= col
    neg_big = jnp.float32(-1e30)

    # NOTE: the reference divides by (1/sqrt(H)) => multiply by sqrt(H).
    scale = jnp.float32(math.sqrt(H))

    wp = wp_ref[...]                            # (C, D) bf16

    acc = jnp.zeros((T, wp.shape[1]), jnp.float32)
    for h in range(n_head):                     # n_head is static -> unrolled
        q = qkv[:, h * H:(h + 1) * H]           # (T, H) f32
        k = qkv[:, C + h * H: C + (h + 1) * H]
        v = qkv[:, 2 * C + h * H: 2 * C + (h + 1) * H]

        s = jnp.dot(q.astype(jnp.bfloat16), k.astype(jnp.bfloat16).T,
                    preferred_element_type=jnp.float32) * scale
        s = jnp.where(causal, s, neg_big)

        # Numerically stable softmax in f32; denominator via EUP reciprocal.
        s = s - jnp.max(s, axis=-1, keepdims=True)
        e = jnp.exp(s)
        att = e * pl.reciprocal(jnp.sum(e, axis=-1, keepdims=True), approx=True)

        head_out = jnp.dot(att.astype(jnp.bfloat16), v.astype(jnp.bfloat16),
                           preferred_element_type=jnp.float32)   # (T, H)

        # Fold the output projection into the head loop: no concat needed.
        acc = acc + jnp.dot(head_out.astype(jnp.bfloat16),
                            wp[h * H:(h + 1) * H, :],
                            preferred_element_type=jnp.float32)

    # NOTE: with real configs (D >= 128) this store is lane-dense; at D=32 the
    # masked partial stores are negligible (B*T = 16 rows total).
    o_ref[0] = (acc + bp_ref[...]).astype(o_ref.dtype)


def multi_masked_attention(x, wq, bq, wk, bk, wv, bv, wp, bp):
    """x: (B,T,D); wq/wk/wv: (n_head,D,H); bq/bk/bv: (n_head,H);
    wp: (n_head*H, D); bp: (1, D). Returns (B,T,D) f32."""
    B, T, D = x.shape
    n_head, _, H = wq.shape
    C = n_head * H

    # Restack per-head weights into fused, lane-dense layouts (wrapper-side
    # layout plumbing; free for XLA) and cast MXU operands to bf16.
    def stack(w):                      # (n_head, D, H) -> (D, n_head*H)
        return jnp.transpose(w, (1, 0, 2)).reshape(D, C)

    wqkv = jnp.concatenate([stack(wq), stack(wk), stack(wv)], axis=1)
    wqkv = wqkv.astype(jnp.bfloat16)                      # (D, 3*C)
    bqkv = jnp.concatenate(
        [bq.reshape(-1), bk.reshape(-1), bv.reshape(-1)]
    ).reshape(1, 3 * C).astype(jnp.float32)               # (1, 3*C)

    x_bf = x.astype(jnp.bfloat16)
    wp_bf = wp.astype(jnp.bfloat16)
    bp_f32 = bp.astype(jnp.float32)

    kernel = functools.partial(_mha_kernel, n_head=n_head, head_size=H)

    return pl.pallas_call(
        kernel,
        out_shape=jax.ShapeDtypeStruct((B, T, D), jnp.float32),
        grid=(B,),
        in_specs=[
            pl.BlockSpec((1, T, D), lambda b: (b, 0, 0)),     # x (per batch, bf16)
            pl.BlockSpec((D, 3 * C), lambda b: (0, 0)),       # fused Wqkv (bf16)
            pl.BlockSpec((1, 3 * C), lambda b: (0, 0)),       # fused bias qkv (f32)
            pl.BlockSpec((C, D), lambda b: (0, 0)),           # Wproj (bf16)
            pl.BlockSpec((1, D), lambda b: (0, 0)),           # bproj (f32)
        ],
        out_specs=pl.BlockSpec((1, T, D), lambda b: (b, 0, 0)),
        compiler_params=pltpu.CompilerParams(
            dimension_semantics=("parallel",)),
    )(x_bf, wqkv, bqkv, wp_bf, bp_f32)


def _reference(x, wq, bq, wk, bk, wv, bv, wp, bp):
    """Pure-JAX f32 reference mirroring the PyTorch forward (eval mode)."""
    B, T, D = x.shape
    n_head, _, H = wq.shape
    mask = jnp.tril(jnp.ones((T, T), jnp.float32)) == 0
    outs = []
    for h in range(n_head):
        q = x @ wq[h] + bq[h]
        k = x @ wk[h] + bk[h]
        v = x @ wv[h] + bv[h]
        s = (q @ jnp.swapaxes(k, -1, -2)) / (1.0 / math.sqrt(H))
        s = jnp.where(mask, -jnp.inf, s)
        a = jax.nn.softmax(s, axis=-1)
        outs.append(a @ v)
    cat = jnp.concatenate(outs, axis=-1)
    return cat @ wp + bp[0]


if __name__ == "__main__":
    # Small shapes consistent with the module.
    B, T, d_model, n_head = 2, 8, 32, 4
    head_size = d_model // n_head            # 8
    block_size = 16                          # tril buffer size (>= seq_len)

    key = jax.random.PRNGKey(0)
    ks = jax.random.split(key, 10)
    scale = 0.02
    x = jax.random.normal(ks[0], (B, T, d_model), jnp.float32)
    wq = scale * jax.random.normal(ks[1], (n_head, d_model, head_size), jnp.float32)
    bq = scale * jax.random.normal(ks[2], (n_head, head_size), jnp.float32)
    wk = scale * jax.random.normal(ks[3], (n_head, d_model, head_size), jnp.float32)
    bk = scale * jax.random.normal(ks[4], (n_head, head_size), jnp.float32)
    wv = scale * jax.random.normal(ks[5], (n_head, d_model, head_size), jnp.float32)
    bv = scale * jax.random.normal(ks[6], (n_head, head_size), jnp.float32)
    wp = scale * jax.random.normal(ks[7], (n_head * head_size, d_model), jnp.float32)
    bp = scale * jax.random.normal(ks[8], (1, d_model), jnp.float32)

    out = multi_masked_attention(x, wq, bq, wk, bk, wv, bv, wp, bp)
    out = jax.block_until_ready(out)

    ref = _reference(x, wq, bq, wk, bk, wv, bv, wp, bp)
    # Tolerance relaxed vs. the all-f32 version because MXU operands are bf16
    # (f32 accumulation); error stays well below these bounds at these scales.
    np.testing.assert_allclose(np.asarray(out), np.asarray(ref),
                               rtol=5e-2, atol=5e-3)

    print("KERNEL_OK")
</pallas_src>

<mosaic_0001>
module attributes {stable_mosaic.version = 11 : i64} {
  func.func @_mha_kernel(%arg0: i32, %arg1: memref<1x8x32xbf16, #tpu.memory_space<vmem>>, %arg2: memref<32x96xbf16, #tpu.memory_space<vmem>>, %arg3: memref<1x96xf32, #tpu.memory_space<vmem>>, %arg4: memref<32x32xbf16, #tpu.memory_space<vmem>>, %arg5: memref<1x32xf32, #tpu.memory_space<vmem>>, %arg6: memref<1x8x32xf32, #tpu.memory_space<vmem>>) attributes {dimension_semantics = [#tpu.dimension_semantics<parallel>], iteration_bounds = array<i64: 2>, scalar_prefetch = 0 : i64, scratch_operands = 0 : i64, tpu.core_type = #tpu.core_type<tc>, window_params = [{transform_indices = @transform_0, window_bounds = array<i64: 1, 8, 32>}, {pipeline_mode = #tpu.pipeline_mode<synchronous>, transform_indices = @transform_1, window_bounds = array<i64: 32, 96>}, {pipeline_mode = #tpu.pipeline_mode<synchronous>, transform_indices = @transform_2, window_bounds = array<i64: 1, 96>}, {pipeline_mode = #tpu.pipeline_mode<synchronous>, transform_indices = @transform_3, window_bounds = array<i64: 32, 32>}, {pipeline_mode = #tpu.pipeline_mode<synchronous>, transform_indices = @transform_4, window_bounds = array<i64: 1, 32>}, {transform_indices = @transform_5, window_bounds = array<i64: 1, 8, 32>}]} {
    %c0 = arith.constant 0 : index
    %c0_0 = arith.constant 0 : index
    %c0_1 = arith.constant 0 : index
    %0 = vector.load %arg1[%c0, %c0_0, %c0_1] : memref<1x8x32xbf16, #tpu.memory_space<vmem>>, vector<1x8x32xbf16>
    %1 = vector.shape_cast %0 : vector<1x8x32xbf16> to vector<8x32xbf16>
    %c0_2 = arith.constant 0 : index
    %c0_3 = arith.constant 0 : index
    %2 = vector.load %arg2[%c0_2, %c0_3] : memref<32x96xbf16, #tpu.memory_space<vmem>>, vector<32x96xbf16>
    %cst = arith.constant dense<0.000000e+00> : vector<8x96xf32>
    %3 = tpu.matmul %1, %2, %cst {dimension_numbers = #tpu.dot_dimension_numbers<[1], [0], [0], [1], [0, 0, 1, 1], [], []>} : vector<8x32xbf16>, vector<32x96xbf16>, vector<8x96xf32> -> vector<8x96xf32>
    %c0_4 = arith.constant 0 : index
    %c0_5 = arith.constant 0 : index
    %4 = vector.load %arg3[%c0_4, %c0_5] : memref<1x96xf32, #tpu.memory_space<vmem>>, vector<1x96xf32>
    %5 = vector.broadcast %4 : vector<1x96xf32> to vector<8x96xf32>
    %6 = arith.addf %3, %5 : vector<8x96xf32>
    %7 = tpu.iota {dimensions = array<i32: 0>} : vector<8x8xi32>
    %8 = tpu.iota {dimensions = array<i32: 1>} : vector<8x8xi32>
    %9 = arith.cmpi sge, %7, %8 : vector<8x8xi32>
    %c0_6 = arith.constant 0 : index
    %c0_7 = arith.constant 0 : index
    %10 = vector.load %arg4[%c0_6, %c0_7] : memref<32x32xbf16, #tpu.memory_space<vmem>>, vector<32x32xbf16>
    %cst_8 = arith.constant 0.000000e+00 : f32
    %11 = vector.broadcast %cst_8 : f32 to vector<8x32xf32>
    %12 = vector.extract_strided_slice %6 {offsets = [0, 0], sizes = [8, 8], strides = [1, 1]} : vector<8x96xf32> to vector<8x8xf32>
    %13 = vector.extract_strided_slice %6 {offsets = [0, 32], sizes = [8, 8], strides = [1, 1]} : vector<8x96xf32> to vector<8x8xf32>
    %14 = vector.extract_strided_slice %6 {offsets = [0, 64], sizes = [8, 8], strides = [1, 1]} : vector<8x96xf32> to vector<8x8xf32>
    %15 = arith.truncf %12 : vector<8x8xf32> to vector<8x8xbf16>
    %16 = arith.truncf %13 : vector<8x8xf32> to vector<8x8xbf16>
    %17 = tpu.transpose %16, [1, 0] : vector<8x8xbf16> -> vector<8x8xbf16>
    %cst_9 = arith.constant dense<0.000000e+00> : vector<8x8xf32>
    %18 = tpu.matmul %15, %17, %cst_9 {dimension_numbers = #tpu.dot_dimension_numbers<[1], [0], [0], [1], [0, 0, 1, 1], [], []>} : vector<8x8xbf16>, vector<8x8xbf16>, vector<8x8xf32> -> vector<8x8xf32>
    %cst_10 = arith.constant 2.82842708 : f32
    %19 = vector.broadcast %cst_10 : f32 to vector<8x8xf32>
    %20 = arith.mulf %18, %19 : vector<8x8xf32>
    %cst_11 = arith.constant -1.000000e+30 : f32
    %21 = vector.broadcast %cst_11 : f32 to vector<8x8xf32>
    %22 = arith.select %9, %20, %21 : vector<8x8xi1>, vector<8x8xf32>
    %cst_12 = arith.constant dense<0xFF800000> : vector<8xf32>
    %23 = vector.multi_reduction <maximumf>, %22, %cst_12 [1] : vector<8x8xf32> to vector<8xf32>
    %24 = vector.shape_cast %23 : vector<8xf32> to vector<8x1xf32>
    %25 = vector.broadcast %24 : vector<8x1xf32> to vector<8x8xf32>
    %26 = arith.subf %22, %25 : vector<8x8xf32>
    %27 = math.exp %26 : vector<8x8xf32>
    %cst_13 = arith.constant dense<0.000000e+00> : vector<8xf32>
    %28 = vector.multi_reduction <add>, %27, %cst_13 [1] : vector<8x8xf32> to vector<8xf32>
    %29 = vector.shape_cast %28 : vector<8xf32> to vector<8x1xf32>
    %30 = tpu.reciprocal %29 {approx = true} : vector<8x1xf32> -> vector<8x1xf32>
    %31 = vector.broadcast %30 : vector<8x1xf32> to vector<8x8xf32>
    %32 = arith.mulf %27, %31 : vector<8x8xf32>
    %33 = arith.truncf %32 : vector<8x8xf32> to vector<8x8xbf16>
    %34 = arith.truncf %14 : vector<8x8xf32> to vector<8x8xbf16>
    %cst_14 = arith.constant dense<0.000000e+00> : vector<8x8xf32>
    %35 = tpu.matmul %33, %34, %cst_14 {dimension_numbers = #tpu.dot_dimension_numbers<[1], [0], [0], [1], [0, 0, 1, 1], [], []>} : vector<8x8xbf16>, vector<8x8xbf16>, vector<8x8xf32> -> vector<8x8xf32>
    %36 = arith.truncf %35 : vector<8x8xf32> to vector<8x8xbf16>
    %37 = vector.extract_strided_slice %10 {offsets = [0, 0], sizes = [8, 32], strides = [1, 1]} : vector<32x32xbf16> to vector<8x32xbf16>
    %cst_15 = arith.constant dense<0.000000e+00> : vector<8x32xf32>
    %38 = tpu.matmul %36, %37, %cst_15 {dimension_numbers = #tpu.dot_dimension_numbers<[1], [0], [0], [1], [0, 0, 1, 1], [], []>} : vector<8x8xbf16>, vector<8x32xbf16>, vector<8x32xf32> -> vector<8x32xf32>
    %39 = arith.addf %11, %38 : vector<8x32xf32>
    %40 = vector.extract_strided_slice %6 {offsets = [0, 8], sizes = [8, 8], strides = [1, 1]} : vector<8x96xf32> to vector<8x8xf32>
    %41 = vector.extract_strided_slice %6 {offsets = [0, 40], sizes = [8, 8], strides = [1, 1]} : vector<8x96xf32> to vector<8x8xf32>
    %42 = vector.extract_strided_slice %6 {offsets = [0, 72], sizes = [8, 8], strides = [1, 1]} : vector<8x96xf32> to vector<8x8xf32>
    %43 = arith.truncf %40 : vector<8x8xf32> to vector<8x8xbf16>
    %44 = arith.truncf %41 : vector<8x8xf32> to vector<8x8xbf16>
    %45 = tpu.transpose %44, [1, 0] : vector<8x8xbf16> -> vector<8x8xbf16>
    %cst_16 = arith.constant dense<0.000000e+00> : vector<8x8xf32>
    %46 = tpu.matmul %43, %45, %cst_16 {dimension_numbers = #tpu.dot_dimension_numbers<[1], [0], [0], [1], [0, 0, 1, 1], [], []>} : vector<8x8xbf16>, vector<8x8xbf16>, vector<8x8xf32> -> vector<8x8xf32>
    %cst_17 = arith.constant 2.82842708 : f32
    %47 = vector.broadcast %cst_17 : f32 to vector<8x8xf32>
    %48 = arith.mulf %46, %47 : vector<8x8xf32>
    %cst_18 = arith.constant -1.000000e+30 : f32
    %49 = vector.broadcast %cst_18 : f32 to vector<8x8xf32>
    %50 = arith.select %9, %48, %49 : vector<8x8xi1>, vector<8x8xf32>
    %cst_19 = arith.constant dense<0xFF800000> : vector<8xf32>
    %51 = vector.multi_reduction <maximumf>, %50, %cst_19 [1] : vector<8x8xf32> to vector<8xf32>
    %52 = vector.shape_cast %51 : vector<8xf32> to vector<8x1xf32>
    %53 = vector.broadcast %52 : vector<8x1xf32> to vector<8x8xf32>
    %54 = arith.subf %50, %53 : vector<8x8xf32>
    %55 = math.exp %54 : vector<8x8xf32>
    %cst_20 = arith.constant dense<0.000000e+00> : vector<8xf32>
    %56 = vector.multi_reduction <add>, %55, %cst_20 [1] : vector<8x8xf32> to vector<8xf32>
    %57 = vector.shape_cast %56 : vector<8xf32> to vector<8x1xf32>
    %58 = tpu.reciprocal %57 {approx = true} : vector<8x1xf32> -> vector<8x1xf32>
    %59 = vector.broadcast %58 : vector<8x1xf32> to vector<8x8xf32>
    %60 = arith.mulf %55, %59 : vector<8x8xf32>
    %61 = arith.truncf %60 : vector<8x8xf32> to vector<8x8xbf16>
    %62 = arith.truncf %42 : vector<8x8xf32> to vector<8x8xbf16>
    %cst_21 = arith.constant dense<0.000000e+00> : vector<8x8xf32>
    %63 = tpu.matmul %61, %62, %cst_21 {dimension_numbers = #tpu.dot_dimension_numbers<[1], [0], [0], [1], [0, 0, 1, 1], [], []>} : vector<8x8xbf16>, vector<8x8xbf16>, vector<8x8xf32> -> vector<8x8xf32>
    %64 = arith.truncf %63 : vector<8x8xf32> to vector<8x8xbf16>
    %65 = vector.extract_strided_slice %10 {offsets = [8, 0], sizes = [8, 32], strides = [1, 1]} : vector<32x32xbf16> to vector<8x32xbf16>
    %cst_22 = arith.constant dense<0.000000e+00> : vector<8x32xf32>
    %66 = tpu.matmul %64, %65, %cst_22 {dimension_numbers = #tpu.dot_dimension_numbers<[1], [0], [0], [1], [0, 0, 1, 1], [], []>} : vector<8x8xbf16>, vector<8x32xbf16>, vector<8x32xf32> -> vector<8x32xf32>
    %67 = arith.addf %39, %66 : vector<8x32xf32>
    %68 = vector.extract_strided_slice %6 {offsets = [0, 16], sizes = [8, 8], strides = [1, 1]} : vector<8x96xf32> to vector<8x8xf32>
    %69 = vector.extract_strided_slice %6 {offsets = [0, 48], sizes = [8, 8], strides = [1, 1]} : vector<8x96xf32> to vector<8x8xf32>
    %70 = vector.extract_strided_slice %6 {offsets = [0, 80], sizes = [8, 8], strides = [1, 1]} : vector<8x96xf32> to vector<8x8xf32>
    %71 = arith.truncf %68 : vector<8x8xf32> to vector<8x8xbf16>
    %72 = arith.truncf %69 : vector<8x8xf32> to vector<8x8xbf16>
    %73 = tpu.transpose %72, [1, 0] : vector<8x8xbf16> -> vector<8x8xbf16>
    %cst_23 = arith.constant dense<0.000000e+00> : vector<8x8xf32>
    %74 = tpu.matmul %71, %73, %cst_23 {dimension_numbers = #tpu.dot_dimension_numbers<[1], [0], [0], [1], [0, 0, 1, 1], [], []>} : vector<8x8xbf16>, vector<8x8xbf16>, vector<8x8xf32> -> vector<8x8xf32>
    %cst_24 = arith.constant 2.82842708 : f32
    %75 = vector.broadcast %cst_24 : f32 to vector<8x8xf32>
    %76 = arith.mulf %74, %75 : vector<8x8xf32>
    %cst_25 = arith.constant -1.000000e+30 : f32
    %77 = vector.broadcast %cst_25 : f32 to vector<8x8xf32>
    %78 = arith.select %9, %76, %77 : vector<8x8xi1>, vector<8x8xf32>
    %cst_26 = arith.constant dense<0xFF800000> : vector<8xf32>
    %79 = vector.multi_reduction <maximumf>, %78, %cst_26 [1] : vector<8x8xf32> to vector<8xf32>
    %80 = vector.shape_cast %79 : vector<8xf32> to vector<8x1xf32>
    %81 = vector.broadcast %80 : vector<8x1xf32> to vector<8x8xf32>
    %82 = arith.subf %78, %81 : vector<8x8xf32>
    %83 = math.exp %82 : vector<8x8xf32>
    %cst_27 = arith.constant dense<0.000000e+00> : vector<8xf32>
    %84 = vector.multi_reduction <add>, %83, %cst_27 [1] : vector<8x8xf32> to vector<8xf32>
    %85 = vector.shape_cast %84 : vector<8xf32> to vector<8x1xf32>
    %86 = tpu.reciprocal %85 {approx = true} : vector<8x1xf32> -> vector<8x1xf32>
    %87 = vector.broadcast %86 : vector<8x1xf32> to vector<8x8xf32>
    %88 = arith.mulf %83, %87 : vector<8x8xf32>
    %89 = arith.truncf %88 : vector<8x8xf32> to vector<8x8xbf16>
    %90 = arith.truncf %70 : vector<8x8xf32> to vector<8x8xbf16>
    %cst_28 = arith.constant dense<0.000000e+00> : vector<8x8xf32>
    %91 = tpu.matmul %89, %90, %cst_28 {dimension_numbers = #tpu.dot_dimension_numbers<[1], [0], [0], [1], [0, 0, 1, 1], [], []>} : vector<8x8xbf16>, vector<8x8xbf16>, vector<8x8xf32> -> vector<8x8xf32>
    %92 = arith.truncf %91 : vector<8x8xf32> to vector<8x8xbf16>
    %93 = vector.extract_strided_slice %10 {offsets = [16, 0], sizes = [8, 32], strides = [1, 1]} : vector<32x32xbf16> to vector<8x32xbf16>
    %cst_29 = arith.constant dense<0.000000e+00> : vector<8x32xf32>
    %94 = tpu.matmul %92, %93, %cst_29 {dimension_numbers = #tpu.dot_dimension_numbers<[1], [0], [0], [1], [0, 0, 1, 1], [], []>} : vector<8x8xbf16>, vector<8x32xbf16>, vector<8x32xf32> -> vector<8x32xf32>
    %95 = arith.addf %67, %94 : vector<8x32xf32>
    %96 = vector.extract_strided_slice %6 {offsets = [0, 24], sizes = [8, 8], strides = [1, 1]} : vector<8x96xf32> to vector<8x8xf32>
    %97 = vector.extract_strided_slice %6 {offsets = [0, 56], sizes = [8, 8], strides = [1, 1]} : vector<8x96xf32> to vector<8x8xf32>
    %98 = vector.extract_strided_slice %6 {offsets = [0, 88], sizes = [8, 8], strides = [1, 1]} : vector<8x96xf32> to vector<8x8xf32>
    %99 = arith.truncf %96 : vector<8x8xf32> to vector<8x8xbf16>
    %100 = arith.truncf %97 : vector<8x8xf32> to vector<8x8xbf16>
    %101 = tpu.transpose %100, [1, 0] : vector<8x8xbf16> -> vector<8x8xbf16>
    %cst_30 = arith.constant dense<0.000000e+00> : vector<8x8xf32>
    %102 = tpu.matmul %99, %101, %cst_30 {dimension_numbers = #tpu.dot_dimension_numbers<[1], [0], [0], [1], [0, 0, 1, 1], [], []>} : vector<8x8xbf16>, vector<8x8xbf16>, vector<8x8xf32> -> vector<8x8xf32>
    %cst_31 = arith.constant 2.82842708 : f32
    %103 = vector.broadcast %cst_31 : f32 to vector<8x8xf32>
    %104 = arith.mulf %102, %103 : vector<8x8xf32>
    %cst_32 = arith.constant -1.000000e+30 : f32
    %105 = vector.broadcast %cst_32 : f32 to vector<8x8xf32>
    %106 = arith.select %9, %104, %105 : vector<8x8xi1>, vector<8x8xf32>
    %cst_33 = arith.constant dense<0xFF800000> : vector<8xf32>
    %107 = vector.multi_reduction <maximumf>, %106, %cst_33 [1] : vector<8x8xf32> to vector<8xf32>
    %108 = vector.shape_cast %107 : vector<8xf32> to vector<8x1xf32>
    %109 = vector.broadcast %108 : vector<8x1xf32> to vector<8x8xf32>
    %110 = arith.subf %106, %109 : vector<8x8xf32>
    %111 = math.exp %110 : vector<8x8xf32>
    %cst_34 = arith.constant dense<0.000000e+00> : vector<8xf32>
    %112 = vector.multi_reduction <add>, %111, %cst_34 [1] : vector<8x8xf32> to vector<8xf32>
    %113 = vector.shape_cast %112 : vector<8xf32> to vector<8x1xf32>
    %114 = tpu.reciprocal %113 {approx = true} : vector<8x1xf32> -> vector<8x1xf32>
    %115 = vector.broadcast %114 : vector<8x1xf32> to vector<8x8xf32>
    %116 = arith.mulf %111, %115 : vector<8x8xf32>
    %117 = arith.truncf %116 : vector<8x8xf32> to vector<8x8xbf16>
    %118 = arith.truncf %98 : vector<8x8xf32> to vector<8x8xbf16>
    %cst_35 = arith.constant dense<0.000000e+00> : vector<8x8xf32>
    %119 = tpu.matmul %117, %118, %cst_35 {dimension_numbers = #tpu.dot_dimension_numbers<[1], [0], [0], [1], [0, 0, 1, 1], [], []>} : vector<8x8xbf16>, vector<8x8xbf16>, vector<8x8xf32> -> vector<8x8xf32>
    %120 = arith.truncf %119 : vector<8x8xf32> to vector<8x8xbf16>
    %121 = vector.extract_strided_slice %10 {offsets = [24, 0], sizes = [8, 32], strides = [1, 1]} : vector<32x32xbf16> to vector<8x32xbf16>
    %cst_36 = arith.constant dense<0.000000e+00> : vector<8x32xf32>
    %122 = tpu.matmul %120, %121, %cst_36 {dimension_numbers = #tpu.dot_dimension_numbers<[1], [0], [0], [1], [0, 0, 1, 1], [], []>} : vector<8x8xbf16>, vector<8x32xbf16>, vector<8x32xf32> -> vector<8x32xf32>
    %123 = arith.addf %95, %122 : vector<8x32xf32>
    %c0_37 = arith.constant 0 : index
    %c0_38 = arith.constant 0 : index
    %124 = vector.load %arg5[%c0_37, %c0_38] : memref<1x32xf32, #tpu.memory_space<vmem>>, vector<1x32xf32>
    %125 = vector.broadcast %124 : vector<1x32xf32> to vector<8x32xf32>
    %126 = arith.addf %123, %125 : vector<8x32xf32>
    %c0_39 = arith.constant 0 : index
    %c0_40 = arith.constant 0 : index
    %c0_41 = arith.constant 0 : index
    %127 = vector.load %arg6[%c0_39, %c0_40, %c0_41] : memref<1x8x32xf32, #tpu.memory_space<vmem>>, vector<1x8x32xf32>
    %128 = vector.shape_cast %127 : vector<1x8x32xf32> to vector<8x32xf32>
    %129 = vector.shape_cast %126 : vector<8x32xf32> to vector<1x8x32xf32>
    tpu.vector_store %arg6[%c0_39, %c0_40, %c0_41], %129 {strides = array<i32>} : memref<1x8x32xf32, #tpu.memory_space<vmem>>, vector<1x8x32xf32>,
    return
  }
  func.func @transform_0(%arg0: i32) -> (i32, i32, i32) {
    %c0_i32 = arith.constant 0 : i32
    %c0_i32_0 = arith.constant 0 : i32
    %c0_i32_1 = arith.constant 0 : i32
    return %arg0, %c0_i32, %c0_i32_0 : i32, i32, i32
  }
  func.func @transform_1(%arg0: i32) -> (i32, i32) {
    %c0_i32 = arith.constant 0 : i32
    %c0_i32_0 = arith.constant 0 : i32
    %c0_i32_1 = arith.constant 0 : i32
    return %c0_i32, %c0_i32_0 : i32, i32
  }
  func.func @transform_2(%arg0: i32) -> (i32, i32) {
    %c0_i32 = arith.constant 0 : i32
    %c0_i32_0 = arith.constant 0 : i32
    %c0_i32_1 = arith.constant 0 : i32
    return %c0_i32, %c0_i32_0 : i32, i32
  }
  func.func @transform_3(%arg0: i32) -> (i32, i32) {
    %c0_i32 = arith.constant 0 : i32
    %c0_i32_0 = arith.constant 0 : i32
    %c0_i32_1 = arith.constant 0 : i32
    return %c0_i32, %c0_i32_0 : i32, i32
  }
  func.func @transform_4(%arg0: i32) -> (i32, i32) {
    %c0_i32 = arith.constant 0 : i32
    %c0_i32_0 = arith.constant 0 : i32
    %c0_i32_1 = arith.constant 0 : i32
    return %c0_i32, %c0_i32_0 : i32, i32
  }
  func.func @transform_5(%arg0: i32) -> (i32, i32, i32) {
    %c0_i32 = arith.constant 0 : i32
    %c0_i32_0 = arith.constant 0 : i32
    %c0_i32_1 = arith.constant 0 : i32
    return %arg0, %c0_i32, %c0_i32_0 : i32, i32, i32
  }
}

</mosaic_0001>

<llo_original>
// kernel: tpu_custom_call.1
$region0: #{tpu_custom_call.1}
  #allocation0 [shape = 'u32[]', space=smem, size = 0x4, offset = 0x4, fixed_abs, tag = 'smem constant byte address 0x4 - core index']
  #allocation1 [shape = 'u32[144,128]{1,0:T(1,128)}', space=vmem, size = 0x12000, scoped, tag = 'internal scratch']
  %s0 = inlined_call_operand.hbm [shape: bf16[2,8,32], index: 0, kind: input, shape index: {}]
  %s1 = inlined_call_operand.hbm [shape: bf16[32,96], index: 1, kind: input, shape index: {}]
  %s2 = inlined_call_operand.vmem [shape: f32[1,96], index: 2, kind: input, shape index: {}]
  %s3 = inlined_call_operand.hbm [shape: bf16[32,32], index: 3, kind: input, shape index: {}]
  %s4 = inlined_call_operand.vmem [shape: f32[1,32], index: 4, kind: input, shape index: {}]
  %s5 = inlined_call_operand.hbm [shape: f32[2,8,32], index: 5, kind: output, shape index: {}]
  %s6 = sld [smem:[#allocation0]]
  $region65: #{tpu_custom_call.1} parent=0
    _
  %s8 = ssub.s32 1, %s6
  %s9 = scalar_select 0, %s8, %s6
  $region1: #{tpu_custom_call.1} parent=0
    #allocation2 [shape = 'u8[4096]{0}', space=vmem, size = 0x1000, scoped, tag = 'input window, operand 0']
    #allocation3 [shape = 's32[2]{0}', space=sflag, size = 0x8, scoped, tag = 'scoped memory for tpu_custom_call.1']
    #allocation4 [shape = 's32[2]{0}', space=sflag, size = 0x8, scoped, tag = 'scoped memory for tpu_custom_call.1']
    #allocation5 [shape = 'u8[8192]{0}', space=vmem, size = 0x2000, scoped, tag = 'input window, operand 1, single buffered']
    #allocation6 [shape = 's32[1]{0}', space=sflag, size = 0x4, scoped, tag = 'scoped memory for tpu_custom_call.1']
    #allocation7 [shape = 'u8[8192]{0}', space=vmem, size = 0x2000, scoped, tag = 'input window, operand 3, single buffered']
    #allocation8 [shape = 'u8[8192]{0}', space=vmem, size = 0x2000, scoped, tag = 'output window, operand 0']
    %10 = vsyncpa [#allocation3], 0
    %s11 = scalar_lea.sflag [#allocation3], 1
    %12 = vsyncpa %s11, 0
    %13 = vsyncpa [#allocation6], 0
    %14 = vsyncpa [#allocation4], 0
    %s15 = scalar_lea.sflag [#allocation4], 1
    %16 = vsyncpa %s15, 0
    loop: start=0, step=1, limit=4
    $region2: #{tpu_custom_call.1} parent=1 // loop_pre_header
      _
    $region3: #{tpu_custom_call.1} parent=1 // loop_header
      %s18 = sphi 0, %s22
      %p19 = scmp.ge.s32.totalorder %s18, 4
      %s28 = sphi 0, %s30
      %s31 = sphi 0, %s28
      %s32 = sphi 0, %s31
      %s48 = sphi 0, %s32
      %s52 = sphi 0, %s52
      %s54 = sphi 0, %s52
      %s55 = sphi 0, %s54
      %s69 = sphi 0, %s55
      %s73 = sphi 0, %s73
      %s75 = sphi 0, %s73
      %s76 = sphi 0, %s75
      %s90 = sphi 0, %s76
      %s94 = sphi 0, %s94
      %s96 = sphi 0, %s94
      %s97 = sphi 0, %s96
      %s111 = sphi 0, %s97
      %s115 = sphi 0, %s115
      %s117 = sphi 0, %s115
      %s118 = sphi 0, %s117
      %s132 = sphi 0, %s118
      %s138 = sphi 0, %s140
      %s141 = sphi 0, %s138
      %s142 = sphi 0, %s141
      %s158 = sphi 0, %s142
    $region4: #{tpu_custom_call.1} parent=1 // loop_header_branch
      %21 = sbr.rel (%p19) target = $region8
    $region5: #{tpu_custom_call.1} parent=1 // loop_body
      %s23 = ssub.s32 %s18, 1
      %s24 = ssub.s32 %s18, 2
      %s25 = sadd.s32 %s18, 1
      %s26 = ssub.s32 %s18, %s25
      %p27 = scmp.eq.s32.totalorder %s26, 0
      %s29 = sadd.s32 %s28, 1
      %s30 = scalar_select %p27, %s28, %s29
      %p33 = pneg %p27
      %p34 = scmp.eq.s32.totalorder %s18, 1
      %p35 = por %p33, %p34
      %p36 = scmp.ne.s32.totalorder %s28, %s31
      %p37 = scmp.eq.s32.totalorder %s18, 0
      %p38 = por %p36, %p37
      %p39 = scmp.ne.s32.totalorder %s28, %s31
      %p40 = scmp.eq.s32.totalorder %s23, 1
      %p41 = por %p39, %p40
      %p42 = scmp.ne.s32.totalorder %s31, %s32
      %p43 = scmp.eq.s32.totalorder %s23, 0
      %p44 = por %p42, %p43
      %p45 = scmp.ne.s32.totalorder %s31, %s32
      %p46 = scmp.eq.s32.totalorder %s24, 1
      %p47 = por %p45, %p46
      %p49 = scmp.ne.s32.totalorder %s32, %s48
      %p50 = scmp.eq.s32.totalorder %s24, 0
      %p51 = por %p49, %p50
      %s53 = sadd.s32 %s52, 1
      %p56 = scmp.eq.s32.totalorder %s18, 1
      %p57 = scmp.ne.s32.totalorder %s52, %s54
      %p58 = scmp.eq.s32.totalorder %s18, 0
      %p59 = por %p57, %p58
      %p60 = scmp.ne.s32.totalorder %s52, %s54
      %p61 = scmp.eq.s32.totalorder %s23, 1
      %p62 = por %p60, %p61
      %p63 = scmp.ne.s32.totalorder %s54, %s55
      %p64 = scmp.eq.s32.totalorder %s23, 0
      %p65 = por %p63, %p64
      %p66 = scmp.ne.s32.totalorder %s54, %s55
      %p67 = scmp.eq.s32.totalorder %s24, 1
      %p68 = por %p66, %p67
      %p70 = scmp.ne.s32.totalorder %s55, %s69
      %p71 = scmp.eq.s32.totalorder %s24, 0
      %p72 = por %p70, %p71
      %s74 = sadd.s32 %s73, 1
      %p77 = scmp.eq.s32.totalorder %s18, 1
      %p78 = scmp.ne.s32.totalorder %s73, %s75
      %p79 = scmp.eq.s32.totalorder %s18, 0
      %p80 = por %p78, %p79
      %p81 = scmp.ne.s32.totalorder %s73, %s75
      %p82 = scmp.eq.s32.totalorder %s23, 1
      %p83 = por %p81, %p82
      %p84 = scmp.ne.s32.totalorder %s75, %s76
      %p85 = scmp.eq.s32.totalorder %s23, 0
      %p86 = por %p84, %p85
      %p87 = scmp.ne.s32.totalorder %s75, %s76
      %p88 = scmp.eq.s32.totalorder %s24, 1
      %p89 = por %p87, %p88
      %p91 = scmp.ne.s32.totalorder %s76, %s90
      %p92 = scmp.eq.s32.totalorder %s24, 0
      %p93 = por %p91, %p92
      %s95 = sadd.s32 %s94, 1
      %p98 = scmp.eq.s32.totalorder %s18, 1
      %p99 = scmp.ne.s32.totalorder %s94, %s96
      %p100 = scmp.eq.s32.totalorder %s18, 0
      %p101 = por %p99, %p100
      %p102 = scmp.ne.s32.totalorder %s94, %s96
      %p103 = scmp.eq.s32.totalorder %s23, 1
      %p104 = por %p102, %p103
      %p105 = scmp.ne.s32.totalorder %s96, %s97
      %p106 = scmp.eq.s32.totalorder %s23, 0
      %p107 = por %p105, %p106
      %p108 = scmp.ne.s32.totalorder %s96, %s97
      %p109 = scmp.eq.s32.totalorder %s24, 1
      %p110 = por %p108, %p109
      %p112 = scmp.ne.s32.totalorder %s97, %s111
      %p113 = scmp.eq.s32.totalorder %s24, 0
      %p114 = por %p112, %p113
      %s116 = sadd.s32 %s115, 1
      %p119 = scmp.eq.s32.totalorder %s18, 1
      %p120 = scmp.ne.s32.totalorder %s115, %s117
      %p121 = scmp.eq.s32.totalorder %s18, 0
      %p122 = por %p120, %p121
      %p123 = scmp.ne.s32.totalorder %s115, %s117
      %p124 = scmp.eq.s32.totalorder %s23, 1
      %p125 = por %p123, %p124
      %p126 = scmp.ne.s32.totalorder %s117, %s118
      %p127 = scmp.eq.s32.totalorder %s23, 0
      %p128 = por %p126, %p127
      %p129 = scmp.ne.s32.totalorder %s117, %s118
      %p130 = scmp.eq.s32.totalorder %s24, 1
      %p131 = por %p129, %p130
      %p133 = scmp.ne.s32.totalorder %s118, %s132
      %p134 = scmp.eq.s32.totalorder %s24, 0
      %p135 = por %p133, %p134
      %s136 = ssub.s32 %s18, %s25
      %p137 = scmp.eq.s32.totalorder %s136, 0
      %s139 = sadd.s32 %s138, 1
      %s140 = scalar_select %p137, %s138, %s139
      %p143 = pneg %p137
      %p144 = scmp.eq.s32.totalorder %s18, 1
      %p145 = por %p143, %p144
      %p146 = scmp.ne.s32.totalorder %s138, %s141
      %p147 = scmp.eq.s32.totalorder %s18, 0
      %p148 = por %p146, %p147
      %p149 = scmp.ne.s32.totalorder %s138, %s141
      %p150 = scmp.eq.s32.totalorder %s23, 1
      %p151 = por %p149, %p150
      %p152 = scmp.ne.s32.totalorder %s141, %s142
      %p153 = scmp.eq.s32.totalorder %s23, 0
      %p154 = por %p152, %p153
      %p155 = scmp.ne.s32.totalorder %s141, %s142
      %p156 = scmp.eq.s32.totalorder %s24, 1
      %p157 = por %p155, %p156
      %p159 = scmp.ne.s32.totalorder %s142, %s158
      %p160 = scmp.eq.s32.totalorder %s24, 0
      %p161 = por %p159, %p160
      %p162 = scmp.le.s32.totalorder 1, %s18
      %p163 = scmp.lt.s32.totalorder %s18, 3
      %p164 = pnand %p162, %p163
      %p165 = pneg %p164
      // Predicated region
      $region9: #{tpu_custom_call.1} parent=5 // pred_check
        _
      $region10: #{tpu_custom_call.1} parent=5 // pred_check_branch
        %167 = sbr.rel (%p164) target = $region12
      $region11: #{tpu_custom_call.1} parent=5 // pred_region
        %s168 = ssub.s32 %s18, 1
        // Predicated region
        $region13: #{tpu_custom_call.1} parent=11 // pred_check
          %p169 = pneg %p65
        $region14: #{tpu_custom_call.1} parent=11 // pred_check_branch
          %171 = sbr.rel (%p169) target = $region16
        $region15: #{tpu_custom_call.1} parent=11 // pred_region
          %s173 = ssub.s32 256, 256
          %174 = vsyncadd [#allocation6], %s173
          %s175 = sshll.u32 [#allocation5], 4
          %s176 = int_to_ptr.vmem [resolvable:$true] %s175
          %181 = dma.hbm_to_vmem [thread:$0]  %s1, 256, %s176, [#allocation6], 64, 64, 4
        $region16: #{tpu_custom_call.1} parent=11 // pred_fallthru
          _
        // Predicated region
        $region17: #{tpu_custom_call.1} parent=11 // pred_check
          %p182 = pneg %p86
        $region18: #{tpu_custom_call.1} parent=11 // pred_check_branch
          %184 = sbr.rel (%p182) target = $region20
        $region19: #{tpu_custom_call.1} parent=11 // pred_region
          _
        $region20: #{tpu_custom_call.1} parent=11 // pred_fallthru
          _
        // Predicated region
        $region21: #{tpu_custom_call.1} parent=11 // pred_check
          %p185 = pneg %p107
        $region22: #{tpu_custom_call.1} parent=11 // pred_check_branch
          %187 = sbr.rel (%p185) target = $region24
        $region23: #{tpu_custom_call.1} parent=11 // pred_region
          %s189 = ssub.s32 256, 256
          %190 = vsyncadd [#allocation6], %s189
          %s191 = sshll.u32 [#allocation7], 4
          %s192 = int_to_ptr.vmem [resolvable:$true] %s191
          %197 = dma.hbm_to_vmem [thread:$0]  %s3, 256, %s192, [#allocation6], 64, 64, 4
        $region24: #{tpu_custom_call.1} parent=11 // pred_fallthru
          _
        // Predicated region
        $region25: #{tpu_custom_call.1} parent=11 // pred_check
          %p198 = pneg %p128
        $region26: #{tpu_custom_call.1} parent=11 // pred_check_branch
          %200 = sbr.rel (%p198) target = $region28
        $region27: #{tpu_custom_call.1} parent=11 // pred_region
          _
        $region28: #{tpu_custom_call.1} parent=11 // pred_fallthru
          _
      $region12: #{tpu_custom_call.1} parent=5 // pred_fallthru
        _
      %p201 = scmp.lt.s32.totalorder %s18, 2
      // Predicated region
      $region29: #{tpu_custom_call.1} parent=5 // pred_check
        %p202 = pneg %p201
      $region30: #{tpu_custom_call.1} parent=5 // pred_check_branch
        %204 = sbr.rel (%p202) target = $region32
      $region31: #{tpu_custom_call.1} parent=5 // pred_region
        // Predicated region
        $region33: #{tpu_custom_call.1} parent=31 // pred_check
          %p205 = pneg %p38
        $region34: #{tpu_custom_call.1} parent=31 // pred_check_branch
          %207 = sbr.rel (%p205) target = $region36
        $region35: #{tpu_custom_call.1} parent=31 // pred_region
          %s208 = sand.u32 %s28, 1
          %s209 = scalar_lea.sflag [#allocation3], %s208
          %s210 = sand.u32 %s28, 1
          %s211 = smul.addr %s210, 4
          %s212 = scalar_lea.vmem [#allocation2], %s211
          %s214 = ssub.s32 64, 64
          %215 = vsyncadd %s209, %s214
          %s216 = smul.addr %s18, 64
          %s217 = scalar_lea.hbm %s0, %s216
          %s219 = sshll.u32 %s212, 4
          %s220 = int_to_ptr.vmem [resolvable:$true] %s219
          %222 = dma.hbm_to_vmem [thread:$0]  %s217, 64, %s220, %s209
        $region36: #{tpu_custom_call.1} parent=31 // pred_fallthru
          _
      $region32: #{tpu_custom_call.1} parent=5 // pred_fallthru
        _
      %p223 = scmp.le.s32.totalorder 1, %s18
      %p224 = scmp.lt.s32.totalorder %s18, 3
      %p225 = pnand %p223, %p224
      %p226 = pneg %p225
      // Predicated region
      $region37: #{tpu_custom_call.1} parent=5 // pred_check
        _
      $region38: #{tpu_custom_call.1} parent=5 // pred_check_branch
        %228 = sbr.rel (%p225) target = $region40
      $region39: #{tpu_custom_call.1} parent=5 // pred_region
        %s229 = ssub.s32 %s18, 1
        %s230 = sand.u32 %s31, 1
        %s231 = scalar_lea.sflag [#allocation3], %s230
        %s232 = sand.u32 %s31, 1
        %s233 = smul.addr %s232, 4
        %s234 = scalar_lea.vmem [#allocation2], %s233
        // Predicated region
        $region41: #{tpu_custom_call.1} parent=39 // pred_check
          %p235 = pneg %p44
        $region42: #{tpu_custom_call.1} parent=39 // pred_check_branch
          %237 = sbr.rel (%p235) target = $region44
        $region43: #{tpu_custom_call.1} parent=39 // pred_region
          %238 = dma.done %s231, 64
        $region44: #{tpu_custom_call.1} parent=39 // pred_fallthru
          _
        // Predicated region
        $region45: #{tpu_custom_call.1} parent=39 // pred_check
          %p239 = pneg %p65
        $region46: #{tpu_custom_call.1} parent=39 // pred_check_branch
          %241 = sbr.rel (%p239) target = $region48
        $region47: #{tpu_custom_call.1} parent=39 // pred_region
          %242 = dma.done [#allocation6], 256
        $region48: #{tpu_custom_call.1} parent=39 // pred_fallthru
          _
        // Predicated region
        $region49: #{tpu_custom_call.1} parent=39 // pred_check
          %p243 = pneg %p107
        $region50: #{tpu_custom_call.1} parent=39 // pred_check_branch
          %245 = sbr.rel (%p243) target = $region52
        $region51: #{tpu_custom_call.1} parent=39 // pred_region
          %246 = dma.done [#allocation6], 256
        $region52: #{tpu_custom_call.1} parent=39 // pred_fallthru
          _
        %s247 = sand.u32 %s31, 1
        %s248 = scalar_lea.sflag [#allocation3], %s247
        %s249 = sand.u32 %s31, 1
        %s250 = smul.addr %s249, 4
        %s251 = scalar_lea.vmem [#allocation2], %s250
        %p252 = pneg %p44
        %p253 = pneg %p41
        %p254 = pneg %p65
        %p255 = pneg %p62
        %p256 = pneg %p86
        %p257 = pneg %p83
        %p258 = pneg %p107
        %p259 = pneg %p104
        %p260 = pneg %p128
        %p261 = pneg %p125
        %p262 = pneg %p154
        %p263 = pneg %p151
        %s264 = sand.u32 %s141, 1
        %s265 = scalar_lea.sflag [#allocation4], %s264
        %s266 = sand.u32 %s141, 1
        %s267 = smul.addr %s266, 8
        %s268 = scalar_lea.vmem [#allocation8], %s267
        %v270 = vld [vmem:[%s234] sm:$0xf]
        %v271 = vld [vmem:[#allocation5] sm:$0xf]
        %v272 = vld [vmem:[#allocation5 + $0x4] sm:$0xf]
        %v273 = vld [vmem:[#allocation5 + $0x8] sm:$0xf]
        %v274 = vld [vmem:[#allocation5 + $0xc] sm:$0xf]
        %v275 = vld [vmem:[%s2] sm:$0x1]
        %v277 = vlaneseq
        %v278 = vshrl.u32 %v277, 7
        %v279 = vsub.s32 0, %v278
        %v280 = vrot.slane %v275, %v279
        %v286 = vunpack.c.l.b16 %v271
        %v287 = vunpack.c.l.b16 %v272
        %v288 = vunpack.c.l.b16 %v273
        %v289 = vunpack.c.l.b16 %v274
        %v290 = vpack.c.b16 %v287, %v286
        %v291 = vpack.c.b16 %v289, %v288
        %vm294 = vcmask 261120
        %v296 = vsel %vm294, %v270, 0
        %298 = vmatprep.subr.bf16.mxu0 0
        %299 = vmatpush1.bf16.msra.mxu0 %v290
        %300 = vmatprep.subr.bf16.mxu0 0
        %301 = vmatpush1.bf16.msra.mxu0 %v291
        %302 = vmatprep.subr.bf16.mxu0 0
        %303 = vmatpush1.bf16.msra.mxu0 0
        %304 = vmatprep.subr.bf16.mxu0 0
        %305 = vmatpush1.bf16.msra.mxu0 0
        %306 = vmatprep.subr.bf16.mxu0 0
        %307 = vmatpush1.bf16.msra.mxu0 0
        %308 = vmatprep.subr.bf16.mxu0 0
        %309 = vmatpush1.bf16.msra.mxu0 0
        %310 = vmatprep.subr.bf16.mxu0 0
        %311 = vmatpush1.bf16.msra.mxu0 0
        %312 = vmatprep.subr.bf16.mxu0 0
        %313 = vmatpush1.bf16.msra.mxu0 0
        %314 = vmatprep.subr.bf16.mxu0 0
        %315 = vmatpush1.bf16.msra.mxu0 0
        %316 = vmatprep.subr.bf16.mxu0 0
        %317 = vmatpush1.bf16.msra.mxu0 0
        %318 = vmatprep.subr.bf16.mxu0 0
        %319 = vmatpush1.bf16.msra.mxu0 0
        %320 = vmatprep.subr.bf16.mxu0 0
        %321 = vmatpush1.bf16.msra.mxu0 0
        %322 = vmatprep.subr.bf16.mxu0 0
        %323 = vmatpush1.bf16.msra.mxu0 0
        %324 = vmatprep.subr.bf16.mxu0 0
        %325 = vmatpush1.bf16.msra.mxu0 0
        %326 = vmatprep.subr.bf16.mxu0 0
        %327 = vmatpush1.bf16.msra.mxu0 0
        %328 = vmatprep.subr.bf16.mxu0 0
        %329 = vmatpush1.bf16.msra.mxu0 0
        %330 = vmatprep.mubr.bf16.mxu0 0
        %331 = vmatmul.mubr.bf16.gmra.mrb[0].mxu0 %v296
        %v332 = vpop.f32.mrb[0].mxu0
        %v333 = vadd.f32 %v280, %v332
        %v334 = vpop.f32.mrb[0].mxu0
        %v335 = vpop.f32.mrb[0].mxu0
        %v336 = vpop.f32.mrb[0].mxu0
        %337 = vdwg.mxu0
        %v338 = vlaneseq
        %v339 = vshrl.u32 %v338, 7
        %v340 = vlaneseq
        %v341 = vand.u32 %v340, 127
        %vm342 = vcmp.ge.s32.totalorder %v339, %v341
        %v343 = vld [vmem:[#allocation7] sm:$0xf]
        %v344 = vld [vmem:[#allocation7 + $0x4] sm:$0xf]
        %v345 = vld [vmem:[#allocation7 + $0x8] sm:$0xf]
        %v346 = vld [vmem:[#allocation7 + $0xc] sm:$0xf]
        %v347 = vpack.c.bf16 %v333, %v333
        %349 = vrot.lane.b32.xlu0 %v347, 96
        %v350 = vpop.permute.xlu0 %349
        %vm351 = vcmask 64512
        %v353 = vsel %vm351, %v347, 0
        %v356 = vsel %vm351, %v350, 0
        %358 = vmatprep.subr.bf16.mxu0 0
        %359 = vmatpush1.bf16.xpose.msra.mxu0 %v356
        %360 = vmatprep.subr.bf16.mxu0 0
        %361 = vmatpush1.bf16.xpose.msra.mxu0 0
        %362 = vmatprep.subr.bf16.mxu0 0
        %363 = vmatpush1.bf16.xpose.msra.mxu0 0
        %364 = vmatprep.subr.bf16.mxu0 0
        %365 = vmatpush1.bf16.xpose.msra.mxu0 0
        %366 = vmatprep.subr.bf16.mxu0 0
        %367 = vmatpush1.bf16.xpose.msra.mxu0 0
        %368 = vmatprep.subr.bf16.mxu0 0
        %369 = vmatpush1.bf16.xpose.msra.mxu0 0
        %370 = vmatprep.subr.bf16.mxu0 0
        %371 = vmatpush1.bf16.xpose.msra.mxu0 0
        %372 = vmatprep.subr.bf16.mxu0 0
        %373 = vmatpush1.bf16.xpose.msra.mxu0 0
        %374 = vmatprep.subr.bf16.mxu0 0
        %375 = vmatpush1.bf16.xpose.msra.mxu0 0
        %376 = vmatprep.subr.bf16.mxu0 0
        %377 = vmatpush1.bf16.xpose.msra.mxu0 0
        %378 = vmatprep.subr.bf16.mxu0 0
        %379 = vmatpush1.bf16.xpose.msra.mxu0 0
        %380 = vmatprep.subr.bf16.mxu0 0
        %381 = vmatpush1.bf16.xpose.msra.mxu0 0
        %382 = vmatprep.subr.bf16.mxu0 0
        %383 = vmatpush1.bf16.xpose.msra.mxu0 0
        %384 = vmatprep.subr.bf16.mxu0 0
        %385 = vmatpush1.bf16.xpose.msra.mxu0 0
        %386 = vmatprep.subr.bf16.mxu0 0
        %387 = vmatpush1.bf16.xpose.msra.mxu0 0
        %388 = vmatprep.subr.bf16.mxu0 0
        %389 = vmatpush1.bf16.xpose.msra.mxu0 0
        %390 = vmatprep.mubr.bf16.mxu0 0
        %391 = vmatmul.mubr.bf16.gmra.mrb[0].mxu0 %v353
        %v392 = vpop.f32.mrb[0].mxu0
        %v393 = vadd.f32 0.0, %v392
        %v394 = vpop.f32.mrb[0].mxu0
        %v395 = vpop.f32.mrb[0].mxu0
        %v396 = vpop.f32.mrb[0].mxu0
        %397 = vdwg.mxu0
        %v398 = vmul.f32 %v393, 2.828427
        %v399 = vsel %vm342, %v398, -1e+30
        %v400 = vsel %vm351, %v399, -inf
        %401 = vmax.xlane.f32.xlu0 %v400
        %v402 = vpop.xlane.xlu0 %401
        %v403 = vsub.f32 %v399, %v402
        %v404 = vmul.f32 %v403, 1.442695
        %v405 = vpow.pop %v404
        %v406 = vsel %vm351, %v405, 0.0
        %407 = vadd.xlane.f32.xlu0 %v406
        %v408 = vpop.xlane.xlu0 %407
        %v409 = vrcp.pop %v408
        %v410 = vmul.f32 %v405, %v409
        %v411 = vpack.c.bf16 %v410, %v410
        %412 = vrot.lane.b32.xlu0 %v347, 64
        %v413 = vpop.permute.xlu0 %412
        %v415 = vsel %vm351, %v411, 0
        %vm417 = vcmask 1043456
        %v419 = vsel %vm417, %v413, 0
        %421 = vmatprep.subr.bf16.mxu0 0
        %422 = vmatpush1.bf16.msra.mxu0 %v419
        %423 = vmatprep.subr.bf16.mxu0 0
        %424 = vmatpush1.bf16.msra.mxu0 0
        %425 = vmatprep.subr.bf16.mxu0 0
        %426 = vmatpush1.bf16.msra.mxu0 0
        %427 = vmatprep.subr.bf16.mxu0 0
        %428 = vmatpush1.bf16.msra.mxu0 0
        %429 = vmatprep.subr.bf16.mxu0 0
        %430 = vmatpush1.bf16.msra.mxu0 0
        %431 = vmatprep.subr.bf16.mxu0 0
        %432 = vmatpush1.bf16.msra.mxu0 0
        %433 = vmatprep.subr.bf16.mxu0 0
        %434 = vmatpush1.bf16.msra.mxu0 0
        %435 = vmatprep.subr.bf16.mxu0 0
        %436 = vmatpush1.bf16.msra.mxu0 0
        %437 = vmatprep.subr.bf16.mxu0 0
        %438 = vmatpush1.bf16.msra.mxu0 0
        %439 = vmatprep.subr.bf16.mxu0 0
        %440 = vmatpush1.bf16.msra.mxu0 0
        %441 = vmatprep.subr.bf16.mxu0 0
        %442 = vmatpush1.bf16.msra.mxu0 0
        %443 = vmatprep.subr.bf16.mxu0 0
        %444 = vmatpush1.bf16.msra.mxu0 0
        %445 = vmatprep.subr.bf16.mxu0 0
        %446 = vmatpush1.bf16.msra.mxu0 0
        %447 = vmatprep.subr.bf16.mxu0 0
        %448 = vmatpush1.bf16.msra.mxu0 0
        %449 = vmatprep.subr.bf16.mxu0 0
        %450 = vmatpush1.bf16.msra.mxu0 0
        %451 = vmatprep.subr.bf16.mxu0 0
        %452 = vmatpush1.bf16.msra.mxu0 0
        %453 = vmatprep.mubr.bf16.mxu0 0
        %454 = vmatmul.mubr.bf16.gmra.mrb[0].mxu0 %v415
        %v455 = vpop.f32.mrb[0].mxu0
        %v456 = vadd.f32 0.0, %v455
        %v457 = vpop.f32.mrb[0].mxu0
        %v458 = vpop.f32.mrb[0].mxu0
        %v459 = vpop.f32.mrb[0].mxu0
        %460 = vdwg.mxu0
        %v461 = vpack.c.bf16 %v456, %v456
        %462 = vrot.lane.b32.xlu0 %v347, 120
        %v463 = vpop.permute.xlu0 %462
        %464 = vrot.lane.b32.xlu0 %v347, 88
        %v465 = vpop.permute.xlu0 %464
        %v467 = vsel %vm351, %v463, 0
        %v470 = vsel %vm351, %v465, 0
        %472 = vmatprep.subr.bf16.mxu0 0
        %473 = vmatpush1.bf16.xpose.msra.mxu0 %v470
        %474 = vmatprep.subr.bf16.mxu0 0
        %475 = vmatpush1.bf16.xpose.msra.mxu0 0
        %476 = vmatprep.subr.bf16.mxu0 0
        %477 = vmatpush1.bf16.xpose.msra.mxu0 0
        %478 = vmatprep.subr.bf16.mxu0 0
        %479 = vmatpush1.bf16.xpose.msra.mxu0 0
        %480 = vmatprep.subr.bf16.mxu0 0
        %481 = vmatpush1.bf16.xpose.msra.mxu0 0
        %482 = vmatprep.subr.bf16.mxu0 0
        %483 = vmatpush1.bf16.xpose.msra.mxu0 0
        %484 = vmatprep.subr.bf16.mxu0 0
        %485 = vmatpush1.bf16.xpose.msra.mxu0 0
        %486 = vmatprep.subr.bf16.mxu0 0
        %487 = vmatpush1.bf16.xpose.msra.mxu0 0
        %488 = vmatprep.subr.bf16.mxu0 0
        %489 = vmatpush1.bf16.xpose.msra.mxu0 0
        %490 = vmatprep.subr.bf16.mxu0 0
        %491 = vmatpush1.bf16.xpose.msra.mxu0 0
        %492 = vmatprep.subr.bf16.mxu0 0
        %493 = vmatpush1.bf16.xpose.msra.mxu0 0
        %494 = vmatprep.subr.bf16.mxu0 0
        %495 = vmatpush1.bf16.xpose.msra.mxu0 0
        %496 = vmatprep.subr.bf16.mxu0 0
        %497 = vmatpush1.bf16.xpose.msra.mxu0 0
        %498 = vmatprep.subr.bf16.mxu0 0
        %499 = vmatpush1.bf16.xpose.msra.mxu0 0
        %500 = vmatprep.subr.bf16.mxu0 0
        %501 = vmatpush1.bf16.xpose.msra.mxu0 0
        %502 = vmatprep.subr.bf16.mxu0 0
        %503 = vmatpush1.bf16.xpose.msra.mxu0 0
        %504 = vmatprep.mubr.bf16.mxu0 0
        %505 = vmatmul.mubr.bf16.gmra.mrb[0].mxu0 %v467
        %v506 = vpop.f32.mrb[0].mxu0
        %v507 = vadd.f32 0.0, %v506
        %v508 = vpop.f32.mrb[0].mxu0
        %v509 = vpop.f32.mrb[0].mxu0
        %v510 = vpop.f32.mrb[0].mxu0
        %511 = vdwg.mxu0
        %v512 = vmul.f32 %v507, 2.828427
        %v513 = vsel %vm342, %v512, -1e+30
        %v514 = vsel %vm351, %v513, -inf
        %515 = vmax.xlane.f32.xlu0 %v514
        %v516 = vpop.xlane.xlu0 %515
        %v517 = vsub.f32 %v513, %v516
        %v518 = vmul.f32 %v517, 1.442695
        %v519 = vpow.pop %v518
        %v520 = vsel %vm351, %v519, 0.0
        %521 = vadd.xlane.f32.xlu0 %v520
        %v522 = vpop.xlane.xlu0 %521
        %v523 = vrcp.pop %v522
        %v524 = vmul.f32 %v519, %v523
        %v525 = vpack.c.bf16 %v524, %v524
        %526 = vrot.lane.b32.xlu0 %v347, 56
        %v527 = vpop.permute.xlu0 %526
        %v529 = vsel %vm351, %v525, 0
        %v532 = vsel %vm417, %v527, 0
        %534 = vmatprep.subr.bf16.mxu0 0
        %535 = vmatpush1.bf16.msra.mxu0 %v532
        %536 = vmatprep.subr.bf16.mxu0 0
        %537 = vmatpush1.bf16.msra.mxu0 0
        %538 = vmatprep.subr.bf16.mxu0 0
        %539 = vmatpush1.bf16.msra.mxu0 0
        %540 = vmatprep.subr.bf16.mxu0 0
        %541 = vmatpush1.bf16.msra.mxu0 0
        %542 = vmatprep.subr.bf16.mxu0 0
        %543 = vmatpush1.bf16.msra.mxu0 0
        %544 = vmatprep.subr.bf16.mxu0 0
        %545 = vmatpush1.bf16.msra.mxu0 0
        %546 = vmatprep.subr.bf16.mxu0 0
        %547 = vmatpush1.bf16.msra.mxu0 0
        %548 = vmatprep.subr.bf16.mxu0 0
        %549 = vmatpush1.bf16.msra.mxu0 0
        %550 = vmatprep.subr.bf16.mxu0 0
        %551 = vmatpush1.bf16.msra.mxu0 0
        %552 = vmatprep.subr.bf16.mxu0 0
        %553 = vmatpush1.bf16.msra.mxu0 0
        %554 = vmatprep.subr.bf16.mxu0 0
        %555 = vmatpush1.bf16.msra.mxu0 0
        %556 = vmatprep.subr.bf16.mxu0 0
        %557 = vmatpush1.bf16.msra.mxu0 0
        %558 = vmatprep.subr.bf16.mxu0 0
        %559 = vmatpush1.bf16.msra.mxu0 0
        %560 = vmatprep.subr.bf16.mxu0 0
        %561 = vmatpush1.bf16.msra.mxu0 0
        %562 = vmatprep.subr.bf16.mxu0 0
        %563 = vmatpush1.bf16.msra.mxu0 0
        %564 = vmatprep.subr.bf16.mxu0 0
        %565 = vmatpush1.bf16.msra.mxu0 0
        %566 = vmatprep.mubr.bf16.mxu0 0
        %567 = vmatmul.mubr.bf16.gmra.mrb[0].mxu0 %v529
        %v568 = vpop.f32.mrb[0].mxu0
        %v569 = vadd.f32 0.0, %v568
        %v570 = vpop.f32.mrb[0].mxu0
        %v571 = vpop.f32.mrb[0].mxu0
        %v572 = vpop.f32.mrb[0].mxu0
        %573 = vdwg.mxu0
        %v574 = vpack.c.bf16 %v569, %v569
        %v576 = vsel %vm351, %v574, 0
        %v579 = vsel %vm417, %v344, 0
        %581 = vmatprep.subr.bf16.mxu0 0
        %582 = vmatpush1.bf16.msra.mxu0 %v579
        %583 = vmatprep.subr.bf16.mxu0 0
        %584 = vmatpush1.bf16.msra.mxu0 0
        %585 = vmatprep.subr.bf16.mxu0 0
        %586 = vmatpush1.bf16.msra.mxu0 0
        %587 = vmatprep.subr.bf16.mxu0 0
        %588 = vmatpush1.bf16.msra.mxu0 0
        %589 = vmatprep.subr.bf16.mxu0 0
        %590 = vmatpush1.bf16.msra.mxu0 0
        %591 = vmatprep.subr.bf16.mxu0 0
        %592 = vmatpush1.bf16.msra.mxu0 0
        %593 = vmatprep.subr.bf16.mxu0 0
        %594 = vmatpush1.bf16.msra.mxu0 0
        %595 = vmatprep.subr.bf16.mxu0 0
        %596 = vmatpush1.bf16.msra.mxu0 0
        %597 = vmatprep.subr.bf16.mxu0 0
        %598 = vmatpush1.bf16.msra.mxu0 0
        %599 = vmatprep.subr.bf16.mxu0 0
        %600 = vmatpush1.bf16.msra.mxu0 0
        %601 = vmatprep.subr.bf16.mxu0 0
        %602 = vmatpush1.bf16.msra.mxu0 0
        %603 = vmatprep.subr.bf16.mxu0 0
        %604 = vmatpush1.bf16.msra.mxu0 0
        %605 = vmatprep.subr.bf16.mxu0 0
        %606 = vmatpush1.bf16.msra.mxu0 0
        %607 = vmatprep.subr.bf16.mxu0 0
        %608 = vmatpush1.bf16.msra.mxu0 0
        %609 = vmatprep.subr.bf16.mxu0 0
        %610 = vmatpush1.bf16.msra.mxu0 0
        %611 = vmatprep.subr.bf16.mxu0 0
        %612 = vmatpush1.bf16.msra.mxu0 0
        %613 = vmatprep.mubr.bf16.mxu0 0
        %614 = vmatmul.mubr.bf16.gmra.mrb[0].mxu0 %v576
        %v615 = vpop.f32.mrb[0].mxu0
        %v616 = vadd.f32 0.0, %v615
        %v617 = vpop.f32.mrb[0].mxu0
        %v618 = vpop.f32.mrb[0].mxu0
        %v619 = vpop.f32.mrb[0].mxu0
        %620 = vdwg.mxu0
        %v622 = vsel %vm351, %v461, 0
        %v625 = vsel %vm417, %v343, 0
        %627 = vmatprep.subr.bf16.mxu0 0
        %628 = vmatpush1.bf16.msra.mxu0 %v625
        %629 = vmatprep.subr.bf16.mxu0 0
        %630 = vmatpush1.bf16.msra.mxu0 0
        %631 = vmatprep.subr.bf16.mxu0 0
        %632 = vmatpush1.bf16.msra.mxu0 0
        %633 = vmatprep.subr.bf16.mxu0 0
        %634 = vmatpush1.bf16.msra.mxu0 0
        %635 = vmatprep.subr.bf16.mxu0 0
        %636 = vmatpush1.bf16.msra.mxu0 0
        %637 = vmatprep.subr.bf16.mxu0 0
        %638 = vmatpush1.bf16.msra.mxu0 0
        %639 = vmatprep.subr.bf16.mxu0 0
        %640 = vmatpush1.bf16.msra.mxu0 0
        %641 = vmatprep.subr.bf16.mxu0 0
        %642 = vmatpush1.bf16.msra.mxu0 0
        %643 = vmatprep.subr.bf16.mxu0 0
        %644 = vmatpush1.bf16.msra.mxu0 0
        %645 = vmatprep.subr.bf16.mxu0 0
        %646 = vmatpush1.bf16.msra.mxu0 0
        %647 = vmatprep.subr.bf16.mxu0 0
        %648 = vmatpush1.bf16.msra.mxu0 0
        %649 = vmatprep.subr.bf16.mxu0 0
        %650 = vmatpush1.bf16.msra.mxu0 0
        %651 = vmatprep.subr.bf16.mxu0 0
        %652 = vmatpush1.bf16.msra.mxu0 0
        %653 = vmatprep.subr.bf16.mxu0 0
        %654 = vmatpush1.bf16.msra.mxu0 0
        %655 = vmatprep.subr.bf16.mxu0 0
        %656 = vmatpush1.bf16.msra.mxu0 0
        %657 = vmatprep.subr.bf16.mxu0 0
        %658 = vmatpush1.bf16.msra.mxu0 0
        %659 = vmatprep.mubr.bf16.mxu0 0
        %660 = vmatmul.mubr.bf16.gmra.mrb[0].mxu0 %v622
        %v661 = vpop.f32.mrb[0].mxu0
        %v662 = vadd.f32 %v616, %v661
        %v663 = vpop.f32.mrb[0].mxu0
        %v664 = vpop.f32.mrb[0].mxu0
        %v665 = vpop.f32.mrb[0].mxu0
        %666 = vdwg.mxu0
        %667 = vrot.lane.b32.xlu0 %v347, 112
        %v668 = vpop.permute.xlu0 %667
        %669 = vrot.lane.b32.xlu0 %v347, 80
        %v670 = vpop.permute.xlu0 %669
        %v672 = vsel %vm351, %v668, 0
        %v675 = vsel %vm351, %v670, 0
        %677 = vmatprep.subr.bf16.mxu0 0
        %678 = vmatpush1.bf16.xpose.msra.mxu0 %v675
        %679 = vmatprep.subr.bf16.mxu0 0
        %680 = vmatpush1.bf16.xpose.msra.mxu0 0
        %681 = vmatprep.subr.bf16.mxu0 0
        %682 = vmatpush1.bf16.xpose.msra.mxu0 0
        %683 = vmatprep.subr.bf16.mxu0 0
        %684 = vmatpush1.bf16.xpose.msra.mxu0 0
        %685 = vmatprep.subr.bf16.mxu0 0
        %686 = vmatpush1.bf16.xpose.msra.mxu0 0
        %687 = vmatprep.subr.bf16.mxu0 0
        %688 = vmatpush1.bf16.xpose.msra.mxu0 0
        %689 = vmatprep.subr.bf16.mxu0 0
        %690 = vmatpush1.bf16.xpose.msra.mxu0 0
        %691 = vmatprep.subr.bf16.mxu0 0
        %692 = vmatpush1.bf16.xpose.msra.mxu0 0
        %693 = vmatprep.subr.bf16.mxu0 0
        %694 = vmatpush1.bf16.xpose.msra.mxu0 0
        %695 = vmatprep.subr.bf16.mxu0 0
        %696 = vmatpush1.bf16.xpose.msra.mxu0 0
        %697 = vmatprep.subr.bf16.mxu0 0
        %698 = vmatpush1.bf16.xpose.msra.mxu0 0
        %699 = vmatprep.subr.bf16.mxu0 0
        %700 = vmatpush1.bf16.xpose.msra.mxu0 0
        %701 = vmatprep.subr.bf16.mxu0 0
        %702 = vmatpush1.bf16.xpose.msra.mxu0 0
        %703 = vmatprep.subr.bf16.mxu0 0
        %704 = vmatpush1.bf16.xpose.msra.mxu0 0
        %705 = vmatprep.subr.bf16.mxu0 0
        %706 = vmatpush1.bf16.xpose.msra.mxu0 0
        %707 = vmatprep.subr.bf16.mxu0 0
        %708 = vmatpush1.bf16.xpose.msra.mxu0 0
        %709 = vmatprep.mubr.bf16.mxu0 0
        %710 = vmatmul.mubr.bf16.gmra.mrb[0].mxu0 %v672
        %v711 = vpop.f32.mrb[0].mxu0
        %v712 = vadd.f32 0.0, %v711
        %v713 = vpop.f32.mrb[0].mxu0
        %v714 = vpop.f32.mrb[0].mxu0
        %v715 = vpop.f32.mrb[0].mxu0
        %716 = vdwg.mxu0
        %v717 = vmul.f32 %v712, 2.828427
        %v718 = vsel %vm342, %v717, -1e+30
        %v719 = vsel %vm351, %v718, -inf
        %720 = vmax.xlane.f32.xlu0 %v719
        %v721 = vpop.xlane.xlu0 %720
        %v722 = vsub.f32 %v718, %v721
        %v723 = vmul.f32 %v722, 1.442695
        %v724 = vpow.pop %v723
        %v725 = vsel %vm351, %v724, 0.0
        %726 = vadd.xlane.f32.xlu0 %v725
        %v727 = vpop.xlane.xlu0 %726
        %v728 = vrcp.pop %v727
        %v729 = vmul.f32 %v724, %v728
        %v730 = vpack.c.bf16 %v729, %v729
        %731 = vrot.lane.b32.xlu0 %v347, 48
        %v732 = vpop.permute.xlu0 %731
        %v734 = vsel %vm351, %v730, 0
        %v737 = vsel %vm417, %v732, 0
        %739 = vmatprep.subr.bf16.mxu0 0
        %740 = vmatpush1.bf16.msra.mxu0 %v737
        %741 = vmatprep.subr.bf16.mxu0 0
        %742 = vmatpush1.bf16.msra.mxu0 0
        %743 = vmatprep.subr.bf16.mxu0 0
        %744 = vmatpush1.bf16.msra.mxu0 0
        %745 = vmatprep.subr.bf16.mxu0 0
        %746 = vmatpush1.bf16.msra.mxu0 0
        %747 = vmatprep.subr.bf16.mxu0 0
        %748 = vmatpush1.bf16.msra.mxu0 0
        %749 = vmatprep.subr.bf16.mxu0 0
        %750 = vmatpush1.bf16.msra.mxu0 0
        %751 = vmatprep.subr.bf16.mxu0 0
        %752 = vmatpush1.bf16.msra.mxu0 0
        %753 = vmatprep.subr.bf16.mxu0 0
        %754 = vmatpush1.bf16.msra.mxu0 0
        %755 = vmatprep.subr.bf16.mxu0 0
        %756 = vmatpush1.bf16.msra.mxu0 0
        %757 = vmatprep.subr.bf16.mxu0 0
        %758 = vmatpush1.bf16.msra.mxu0 0
        %759 = vmatprep.subr.bf16.mxu0 0
        %760 = vmatpush1.bf16.msra.mxu0 0
        %761 = vmatprep.subr.bf16.mxu0 0
        %762 = vmatpush1.bf16.msra.mxu0 0
        %763 = vmatprep.subr.bf16.mxu0 0
        %764 = vmatpush1.bf16.msra.mxu0 0
        %765 = vmatprep.subr.bf16.mxu0 0
        %766 = vmatpush1.bf16.msra.mxu0 0
        %767 = vmatprep.subr.bf16.mxu0 0
        %768 = vmatpush1.bf16.msra.mxu0 0
        %769 = vmatprep.subr.bf16.mxu0 0
        %770 = vmatpush1.bf16.msra.mxu0 0
        %771 = vmatprep.mubr.bf16.mxu0 0
        %772 = vmatmul.mubr.bf16.gmra.mrb[0].mxu0 %v734
        %v773 = vpop.f32.mrb[0].mxu0
        %v774 = vadd.f32 0.0, %v773
        %v775 = vpop.f32.mrb[0].mxu0
        %v776 = vpop.f32.mrb[0].mxu0
        %v777 = vpop.f32.mrb[0].mxu0
        %778 = vdwg.mxu0
        %v779 = vpack.c.bf16 %v774, %v774
        %v781 = vsel %vm351, %v779, 0
        %v784 = vsel %vm417, %v345, 0
        %786 = vmatprep.subr.bf16.mxu0 0
        %787 = vmatpush1.bf16.msra.mxu0 %v784
        %788 = vmatprep.subr.bf16.mxu0 0
        %789 = vmatpush1.bf16.msra.mxu0 0
        %790 = vmatprep.subr.bf16.mxu0 0
        %791 = vmatpush1.bf16.msra.mxu0 0
        %792 = vmatprep.subr.bf16.mxu0 0
        %793 = vmatpush1.bf16.msra.mxu0 0
        %794 = vmatprep.subr.bf16.mxu0 0
        %795 = vmatpush1.bf16.msra.mxu0 0
        %796 = vmatprep.subr.bf16.mxu0 0
        %797 = vmatpush1.bf16.msra.mxu0 0
        %798 = vmatprep.subr.bf16.mxu0 0
        %799 = vmatpush1.bf16.msra.mxu0 0
        %800 = vmatprep.subr.bf16.mxu0 0
        %801 = vmatpush1.bf16.msra.mxu0 0
        %802 = vmatprep.subr.bf16.mxu0 0
        %803 = vmatpush1.bf16.msra.mxu0 0
        %804 = vmatprep.subr.bf16.mxu0 0
        %805 = vmatpush1.bf16.msra.mxu0 0
        %806 = vmatprep.subr.bf16.mxu0 0
        %807 = vmatpush1.bf16.msra.mxu0 0
        %808 = vmatprep.subr.bf16.mxu0 0
        %809 = vmatpush1.bf16.msra.mxu0 0
        %810 = vmatprep.subr.bf16.mxu0 0
        %811 = vmatpush1.bf16.msra.mxu0 0
        %812 = vmatprep.subr.bf16.mxu0 0
        %813 = vmatpush1.bf16.msra.mxu0 0
        %814 = vmatprep.subr.bf16.mxu0 0
        %815 = vmatpush1.bf16.msra.mxu0 0
        %816 = vmatprep.subr.bf16.mxu0 0
        %817 = vmatpush1.bf16.msra.mxu0 0
        %818 = vmatprep.mubr.bf16.mxu0 0
        %819 = vmatmul.mubr.bf16.gmra.mrb[0].mxu0 %v781
        %v820 = vpop.f32.mrb[0].mxu0
        %v821 = vadd.f32 0.0, %v820
        %v822 = vpop.f32.mrb[0].mxu0
        %v823 = vpop.f32.mrb[0].mxu0
        %v824 = vpop.f32.mrb[0].mxu0
        %825 = vdwg.mxu0
        %v826 = vadd.f32 %v662, %v821
        %827 = vrot.lane.b32.xlu0 %v347, 104
        %v828 = vpop.permute.xlu0 %827
        %829 = vrot.lane.b32.xlu0 %v347, 72
        %v830 = vpop.permute.xlu0 %829
        %v832 = vsel %vm351, %v828, 0
        %v835 = vsel %vm351, %v830, 0
        %837 = vmatprep.subr.bf16.mxu0 0
        %838 = vmatpush1.bf16.xpose.msra.mxu0 %v835
        %839 = vmatprep.subr.bf16.mxu0 0
        %840 = vmatpush1.bf16.xpose.msra.mxu0 0
        %841 = vmatprep.subr.bf16.mxu0 0
        %842 = vmatpush1.bf16.xpose.msra.mxu0 0
        %843 = vmatprep.subr.bf16.mxu0 0
        %844 = vmatpush1.bf16.xpose.msra.mxu0 0
        %845 = vmatprep.subr.bf16.mxu0 0
        %846 = vmatpush1.bf16.xpose.msra.mxu0 0
        %847 = vmatprep.subr.bf16.mxu0 0
        %848 = vmatpush1.bf16.xpose.msra.mxu0 0
        %849 = vmatprep.subr.bf16.mxu0 0
        %850 = vmatpush1.bf16.xpose.msra.mxu0 0
        %851 = vmatprep.subr.bf16.mxu0 0
        %852 = vmatpush1.bf16.xpose.msra.mxu0 0
        %853 = vmatprep.subr.bf16.mxu0 0
        %854 = vmatpush1.bf16.xpose.msra.mxu0 0
        %855 = vmatprep.subr.bf16.mxu0 0
        %856 = vmatpush1.bf16.xpose.msra.mxu0 0
        %857 = vmatprep.subr.bf16.mxu0 0
        %858 = vmatpush1.bf16.xpose.msra.mxu0 0
        %859 = vmatprep.subr.bf16.mxu0 0
        %860 = vmatpush1.bf16.xpose.msra.mxu0 0
        %861 = vmatprep.subr.bf16.mxu0 0
        %862 = vmatpush1.bf16.xpose.msra.mxu0 0
        %863 = vmatprep.subr.bf16.mxu0 0
        %864 = vmatpush1.bf16.xpose.msra.mxu0 0
        %865 = vmatprep.subr.bf16.mxu0 0
        %866 = vmatpush1.bf16.xpose.msra.mxu0 0
        %867 = vmatprep.subr.bf16.mxu0 0
        %868 = vmatpush1.bf16.xpose.msra.mxu0 0
        %869 = vmatprep.mubr.bf16.mxu0 0
        %870 = vmatmul.mubr.bf16.gmra.mrb[0].mxu0 %v832
        %v871 = vpop.f32.mrb[0].mxu0
        %v872 = vadd.f32 0.0, %v871
        %v873 = vpop.f32.mrb[0].mxu0
        %v874 = vpop.f32.mrb[0].mxu0
        %v875 = vpop.f32.mrb[0].mxu0
        %876 = vdwg.mxu0
        %v877 = vmul.f32 %v872, 2.828427
        %v878 = vsel %vm342, %v877, -1e+30
        %v879 = vsel %vm351, %v878, -inf
        %880 = vmax.xlane.f32.xlu0 %v879
        %v881 = vpop.xlane.xlu0 %880
        %v882 = vsub.f32 %v878, %v881
        %v883 = vmul.f32 %v882, 1.442695
        %v884 = vpow.pop %v883
        %v885 = vsel %vm351, %v884, 0.0
        %886 = vadd.xlane.f32.xlu0 %v885
        %v887 = vpop.xlane.xlu0 %886
        %v888 = vrcp.pop %v887
        %v889 = vmul.f32 %v884, %v888
        %v890 = vpack.c.bf16 %v889, %v889
        %891 = vrot.lane.b32.xlu0 %v347, 40
        %v892 = vpop.permute.xlu0 %891
        %v894 = vsel %vm351, %v890, 0
        %v897 = vsel %vm417, %v892, 0
        %899 = vmatprep.subr.bf16.mxu0 0
        %900 = vmatpush1.bf16.msra.mxu0 %v897
        %901 = vmatprep.subr.bf16.mxu0 0
        %902 = vmatpush1.bf16.msra.mxu0 0
        %903 = vmatprep.subr.bf16.mxu0 0
        %904 = vmatpush1.bf16.msra.mxu0 0
        %905 = vmatprep.subr.bf16.mxu0 0
        %906 = vmatpush1.bf16.msra.mxu0 0
        %907 = vmatprep.subr.bf16.mxu0 0
        %908 = vmatpush1.bf16.msra.mxu0 0
        %909 = vmatprep.subr.bf16.mxu0 0
        %910 = vmatpush1.bf16.msra.mxu0 0
        %911 = vmatprep.subr.bf16.mxu0 0
        %912 = vmatpush1.bf16.msra.mxu0 0
        %913 = vmatprep.subr.bf16.mxu0 0
        %914 = vmatpush1.bf16.msra.mxu0 0
        %915 = vmatprep.subr.bf16.mxu0 0
        %916 = vmatpush1.bf16.msra.mxu0 0
        %917 = vmatprep.subr.bf16.mxu0 0
        %918 = vmatpush1.bf16.msra.mxu0 0
        %919 = vmatprep.subr.bf16.mxu0 0
        %920 = vmatpush1.bf16.msra.mxu0 0
        %921 = vmatprep.subr.bf16.mxu0 0
        %922 = vmatpush1.bf16.msra.mxu0 0
        %923 = vmatprep.subr.bf16.mxu0 0
        %924 = vmatpush1.bf16.msra.mxu0 0
        %925 = vmatprep.subr.bf16.mxu0 0
        %926 = vmatpush1.bf16.msra.mxu0 0
        %927 = vmatprep.subr.bf16.mxu0 0
        %928 = vmatpush1.bf16.msra.mxu0 0
        %929 = vmatprep.subr.bf16.mxu0 0
        %930 = vmatpush1.bf16.msra.mxu0 0
        %931 = vmatprep.mubr.bf16.mxu0 0
        %932 = vmatmul.mubr.bf16.gmra.mrb[0].mxu0 %v894
        %v933 = vpop.f32.mrb[0].mxu0
        %v934 = vadd.f32 0.0, %v933
        %v935 = vpop.f32.mrb[0].mxu0
        %v936 = vpop.f32.mrb[0].mxu0
        %v937 = vpop.f32.mrb[0].mxu0
        %938 = vdwg.mxu0
        %v939 = vpack.c.bf16 %v934, %v934
        %v941 = vsel %vm351, %v939, 0
        %v944 = vsel %vm417, %v346, 0
        %946 = vmatprep.subr.bf16.mxu0 0
        %947 = vmatpush1.bf16.msra.mxu0 %v944
        %948 = vmatprep.subr.bf16.mxu0 0
        %949 = vmatpush1.bf16.msra.mxu0 0
        %950 = vmatprep.subr.bf16.mxu0 0
        %951 = vmatpush1.bf16.msra.mxu0 0
        %952 = vmatprep.subr.bf16.mxu0 0
        %953 = vmatpush1.bf16.msra.mxu0 0
        %954 = vmatprep.subr.bf16.mxu0 0
        %955 = vmatpush1.bf16.msra.mxu0 0
        %956 = vmatprep.subr.bf16.mxu0 0
        %957 = vmatpush1.bf16.msra.mxu0 0
        %958 = vmatprep.subr.bf16.mxu0 0
        %959 = vmatpush1.bf16.msra.mxu0 0
        %960 = vmatprep.subr.bf16.mxu0 0
        %961 = vmatpush1.bf16.msra.mxu0 0
        %962 = vmatprep.subr.bf16.mxu0 0
        %963 = vmatpush1.bf16.msra.mxu0 0
        %964 = vmatprep.subr.bf16.mxu0 0
        %965 = vmatpush1.bf16.msra.mxu0 0
        %966 = vmatprep.subr.bf16.mxu0 0
        %967 = vmatpush1.bf16.msra.mxu0 0
        %968 = vmatprep.subr.bf16.mxu0 0
        %969 = vmatpush1.bf16.msra.mxu0 0
        %970 = vmatprep.subr.bf16.mxu0 0
        %971 = vmatpush1.bf16.msra.mxu0 0
        %972 = vmatprep.subr.bf16.mxu0 0
        %973 = vmatpush1.bf16.msra.mxu0 0
        %974 = vmatprep.subr.bf16.mxu0 0
        %975 = vmatpush1.bf16.msra.mxu0 0
        %976 = vmatprep.subr.bf16.mxu0 0
        %977 = vmatpush1.bf16.msra.mxu0 0
        %978 = vmatprep.mubr.bf16.mxu0 0
        %979 = vmatmul.mubr.bf16.gmra.mrb[0].mxu0 %v941
        %v980 = vpop.f32.mrb[0].mxu0
        %v981 = vadd.f32 0.0, %v980
        %v982 = vpop.f32.mrb[0].mxu0
        %v983 = vpop.f32.mrb[0].mxu0
        %v984 = vpop.f32.mrb[0].mxu0
        %985 = vdwg.mxu0
        %v986 = vadd.f32 %v826, %v981
        %v987 = vld [vmem:[%s4] sm:$0x1]
        %v989 = vlaneseq
        %v990 = vshrl.u32 %v989, 7
        %v991 = vsub.s32 0, %v990
        %v992 = vrot.slane %v987, %v991
        %v994 = vadd.f32 %v986, %v992
        %995 = vst.msk [vmem:[%s268] sm:$0xff] %vm294, %v994
        %s996 = sand.u32 %s141, 1
        %s997 = scalar_lea.sflag [#allocation4], %s996
        %s998 = sand.u32 %s141, 1
        %s999 = smul.addr %s998, 8
        %s1000 = scalar_lea.vmem [#allocation8], %s999
        // Predicated region
        $region53: #{tpu_custom_call.1} parent=39 // pred_check
          %p1001 = pneg %p151
        $region54: #{tpu_custom_call.1} parent=39 // pred_check_branch
          %1003 = sbr.rel (%p1001) target = $region56
        $region55: #{tpu_custom_call.1} parent=39 // pred_region
          %s1005 = ssub.s32 128, 128
          %1006 = vsyncadd %s997, %s1005
          %s1007 = smul.addr %s23, 128
          %s1008 = scalar_lea.hbm %s5, %s1007
          %s1010 = sshll.u32 %s1000, 4
          %s1011 = int_to_ptr.vmem [resolvable:$true] %s1010
          %1013 = dma.vmem_to_hbm [thread:$0]  %s1011, 128, %s1008, %s997
        $region56: #{tpu_custom_call.1} parent=39 // pred_fallthru
          _
      $region40: #{tpu_custom_call.1} parent=5 // pred_fallthru
        _
      %p1014 = scmp.le.s32.totalorder 2, %s18
      // Predicated region
      $region57: #{tpu_custom_call.1} parent=5 // pred_check
        %p1015 = pneg %p1014
      $region58: #{tpu_custom_call.1} parent=5 // pred_check_branch
        %1017 = sbr.rel (%p1015) target = $region60
      $region59: #{tpu_custom_call.1} parent=5 // pred_region
        %s1018 = ssub.s32 %s18, 2
        // Predicated region
        $region61: #{tpu_custom_call.1} parent=59 // pred_check
          %p1019 = pneg %p157
        $region62: #{tpu_custom_call.1} parent=59 // pred_check_branch
          %1021 = sbr.rel (%p1019) target = $region64
        $region63: #{tpu_custom_call.1} parent=59 // pred_region
          %s1022 = sand.u32 %s142, 1
          %s1023 = scalar_lea.sflag [#allocation4], %s1022
          %s1024 = sand.u32 %s142, 1
          %s1025 = smul.addr %s1024, 8
          %s1026 = scalar_lea.vmem [#allocation8], %s1025
          %1027 = dma.done %s1023, 128
        $region64: #{tpu_custom_call.1} parent=59 // pred_fallthru
          _
      $region60: #{tpu_custom_call.1} parent=5 // pred_fallthru
        _
    $region6: #{tpu_custom_call.1} parent=1 // loop_footer
      %s22 = sadd.s32 1, %s18
    $region7: #{tpu_custom_call.1} parent=1 // loop_footer_branch
      %17 = sbr.rel target = $region3
    $region8: #{tpu_custom_call.1} parent=1 // loop_exit
      _
    %1028 = vsyncpa [#allocation3], 1
    %s1029 = scalar_lea.sflag [#allocation3], 1
    %1030 = vsyncpa %s1029, 1
    %1031 = vsyncpa [#allocation6], 1
    %1032 = vsyncpa [#allocation4], 1
    %s1033 = scalar_lea.sflag [#allocation4], 1
    %1034 = vsyncpa %s1033, 1

</llo_original>
